<compile_context>
chip_gen: v7x
topology: tpu7x:2x2x1
jax: 0.10.0
libtpu: 0.0.40
codegen_flags: <defaults>
</compile_context>

<pallas_src>
import jax
import jax.numpy as jnp
from jax import lax
from jax.experimental import pallas as pl
from jax.experimental.pallas import tpu as pltpu

LANES = 128
MAX_BLOCK_ROWS = 1024      # multiple of 32 -> valid sublane tiling for f32 and bf16
NUM_SPLIT = 2              # leading "parallel" grid axis (both TCs on v7x)


def _make_kernel(block_rows, steps_per_core, valid_rows):
    """Builds the kernel closing over the (static) tiling parameters."""

    def kernel(x_ref, t_ref, out_ref, acc_i, acc_x, acc_t, acc_b):
        j = pl.program_id(1)

        @pl.when(j == 0)
        def _init():
            acc_i[...] = jnp.zeros_like(acc_i)
            acc_x[...] = jnp.zeros_like(acc_x)
            acc_t[...] = jnp.zeros_like(acc_t)
            acc_b[...] = jnp.zeros_like(acc_b)

        # Logical (unclamped) block index of this grid step.  Rows belonging to
        # duplicated tail steps (core split) or pipeline edge padding are
        # masked to zero so they contribute nothing to any sum.
        c = pl.program_id(0)
        blk = c * steps_per_core + j
        row = blk * block_rows + lax.broadcasted_iota(
            jnp.int32, (block_rows, LANES), 0)
        valid = row < valid_rows

        x = jnp.where(valid, x_ref[...].astype(jnp.float32), 0.0)
        t = jnp.where(valid, t_ref[...].astype(jnp.float32), 0.0)

        # Pure element-wise accumulation (VPU); cross-lane work deferred to end.
        acc_i[...] += x * t
        acc_x[...] += x
        acc_t[...] += t
        # PyTorch binary_cross_entropy clamps the logs at -100; masked lanes
        # (x = t = 0) then contribute exactly 0 to the BCE sum.
        log_p = jnp.maximum(jnp.log(x), -100.0)
        log_1mp = jnp.maximum(jnp.log(1.0 - x), -100.0)
        acc_b[...] += -(t * log_p + (1.0 - t) * log_1mp)

        @pl.when(j == steps_per_core - 1)
        def _finalize():
            part = jnp.concatenate(
                [
                    jnp.sum(acc_i[...], axis=0, keepdims=True),
                    jnp.sum(acc_x[...], axis=0, keepdims=True),
                    jnp.sum(acc_t[...], axis=0, keepdims=True),
                    jnp.sum(acc_b[...], axis=0, keepdims=True),
                ],
                axis=0,
            )  # (4, LANES) lane partials for this core-split chunk.
            out_ref[...] = part[None, :, :]

    return kernel


def dice_bce_loss(inputs, targets, smooth=1.0):
    """Pallas implementation of DiceBCELoss.forward.

    `inputs` are probabilities (as required by F.binary_cross_entropy),
    `targets` are in [0, 1].  Returns a float32 scalar.
    """
    n = inputs.size
    x = jnp.reshape(inputs, (-1,))
    t = jnp.reshape(targets, (-1,))

    # Only pad (with zeros) when numel is not a multiple of the 128-lane
    # width; zero (x, t) pairs contribute 0 to every partial sum.
    if n % LANES:
        pad = LANES - n % LANES
        x = jnp.pad(x, (0, pad))
        t = jnp.pad(t, (0, pad))
    rows = x.size // LANES
    x2 = x.reshape(rows, LANES)
    t2 = t.reshape(rows, LANES)

    # Full-array block (always legal) for small inputs, big (8-aligned) tiles
    # for large ones; edge/duplicate blocks are masked inside the kernel.
    block_rows = rows if rows <= MAX_BLOCK_ROWS else MAX_BLOCK_ROWS
    num_blocks = pl.cdiv(rows, block_rows)
    steps_per_core = pl.cdiv(num_blocks, NUM_SPLIT)

    def in_index_map(c, j):
        # Clamp so duplicated tail steps re-read the last real block (whose
        # contribution the kernel masks to zero) instead of going OOB.
        return (jnp.minimum(c * steps_per_core + j, num_blocks - 1), 0)

    in_spec = pl.BlockSpec((block_rows, LANES), in_index_map)
    out_spec = pl.BlockSpec((1, 4, LANES), lambda c, j: (c, 0, 0))

    partials = pl.pallas_call(
        _make_kernel(block_rows, steps_per_core, rows),
        out_shape=jax.ShapeDtypeStruct((NUM_SPLIT, 4, LANES), jnp.float32),
        grid_spec=pltpu.PrefetchScalarGridSpec(
            num_scalar_prefetch=0,
            grid=(NUM_SPLIT, steps_per_core),
            in_specs=[in_spec, in_spec],
            out_specs=out_spec,
            scratch_shapes=[pltpu.VMEM((block_rows, LANES), jnp.float32)] * 4,
        ),
        compiler_params=pltpu.CompilerParams(
            dimension_semantics=("parallel", "arbitrary"),
        ),
    )(x2, t2)

    sums = jnp.sum(partials, axis=(0, 2))  # (4,): inter, sum(x), sum(t), sum(bce)
    inter, sx, st, bce_sum = sums[0], sums[1], sums[2], sums[3]

    bce_mean = bce_sum / jnp.float32(n)
    dice_loss = 1.0 - (2.0 * inter + smooth) / (sx + st + smooth)
    return bce_mean + dice_loss


def _reference(inputs, targets, smooth=1.0):
    xi = inputs.reshape(-1)
    ti = targets.reshape(-1)
    inter = jnp.sum(xi * ti)
    dice = 1.0 - (2.0 * inter + smooth) / (jnp.sum(xi) + jnp.sum(ti) + smooth)
    bce = jnp.mean(-(ti * jnp.log(xi) + (1.0 - ti) * jnp.log(1.0 - xi)))
    return bce + dice


if __name__ == "__main__":
    key = jax.random.PRNGKey(0)
    k1, k2, k3, k4 = jax.random.split(key, 4)

    # Small shapes consistent with a segmentation head output: [B, C, H, W].
    B, C, H, W = 2, 4, 16, 16
    logits = jax.random.normal(k1, (B, C, H, W), dtype=jnp.float32)
    inputs = jax.nn.sigmoid(logits)                        # probabilities
    targets = jax.random.bernoulli(k2, 0.5, (B, C, H, W)).astype(jnp.float32)

    loss = dice_bce_loss(inputs, targets, smooth=1.0)
    jax.block_until_ready(loss)
    ref = _reference(inputs, targets, smooth=1.0)
    assert jnp.allclose(loss, ref, rtol=1e-5, atol=1e-5), (loss, ref)

    # Second (still small) case exercising the multi-block / core-split /
    # edge-masking path: 2*4*160*160 = 204800 elems -> 1600 rows > BLOCK_ROWS.
    B2, C2, H2, W2 = 2, 4, 160, 160
    logits2 = jax.random.normal(k3, (B2, C2, H2, W2), dtype=jnp.float32)
    inputs2 = jax.nn.sigmoid(logits2)
    targets2 = jax.random.bernoulli(k4, 0.5, (B2, C2, H2, W2)).astype(jnp.float32)

    loss2 = dice_bce_loss(inputs2, targets2, smooth=1.0)
    jax.block_until_ready(loss2)
    ref2 = _reference(inputs2, targets2, smooth=1.0)
    assert jnp.allclose(loss2, ref2, rtol=1e-4, atol=1e-4), (loss2, ref2)

    print("KERNEL_OK")
</pallas_src>

<mosaic_0001>
module attributes {stable_mosaic.version = 11 : i64} {
  func.func @kernel(%arg0: i32, %arg1: i32, %arg2: memref<16x128xf32, #tpu.memory_space<vmem>>, %arg3: memref<16x128xf32, #tpu.memory_space<vmem>>, %arg4: memref<1x4x128xf32, #tpu.memory_space<vmem>>, %arg5: memref<16x128xf32, #tpu.memory_space<vmem>>, %arg6: memref<16x128xf32, #tpu.memory_space<vmem>>, %arg7: memref<16x128xf32, #tpu.memory_space<vmem>>, %arg8: memref<16x128xf32, #tpu.memory_space<vmem>>) attributes {dimension_semantics = [#tpu.dimension_semantics<parallel>, #tpu.dimension_semantics<arbitrary>], iteration_bounds = array<i64: 2, 1>, scalar_prefetch = 0 : i64, scratch_operands = 4 : i64, tpu.core_type = #tpu.core_type<tc>, window_params = [{transform_indices = @transform_0, window_bounds = array<i64: 16, 128>}, {transform_indices = @transform_1, window_bounds = array<i64: 16, 128>}, {transform_indices = @transform_2, window_bounds = array<i64: 1, 4, 128>}]} {
    %c0_i32 = arith.constant 0 : i32
    %0 = arith.cmpi eq, %arg1, %c0_i32 : i32
    %1 = arith.extui %0 : i1 to i32
    %c0_i32_0 = arith.constant 0 : i32
    %2 = arith.cmpi ne, %1, %c0_i32_0 : i32
    scf.if %2 {
      %cst_29 = arith.constant 0.000000e+00 : f32
      %48 = vector.broadcast %cst_29 : f32 to vector<16x128xf32>
      %c0_30 = arith.constant 0 : index
      %c0_31 = arith.constant 0 : index
      %49 = vector.load %arg5[%c0_30, %c0_31] : memref<16x128xf32, #tpu.memory_space<vmem>>, vector<16x128xf32>
      tpu.vector_store %arg5[%c0_30, %c0_31], %48 {strides = array<i32>} : memref<16x128xf32, #tpu.memory_space<vmem>>, vector<16x128xf32>,
      %cst_32 = arith.constant 0.000000e+00 : f32
      %50 = vector.broadcast %cst_32 : f32 to vector<16x128xf32>
      %c0_33 = arith.constant 0 : index
      %c0_34 = arith.constant 0 : index
      %51 = vector.load %arg6[%c0_33, %c0_34] : memref<16x128xf32, #tpu.memory_space<vmem>>, vector<16x128xf32>
      tpu.vector_store %arg6[%c0_33, %c0_34], %50 {strides = array<i32>} : memref<16x128xf32, #tpu.memory_space<vmem>>, vector<16x128xf32>,
      %cst_35 = arith.constant 0.000000e+00 : f32
      %52 = vector.broadcast %cst_35 : f32 to vector<16x128xf32>
      %c0_36 = arith.constant 0 : index
      %c0_37 = arith.constant 0 : index
      %53 = vector.load %arg7[%c0_36, %c0_37] : memref<16x128xf32, #tpu.memory_space<vmem>>, vector<16x128xf32>
      tpu.vector_store %arg7[%c0_36, %c0_37], %52 {strides = array<i32>} : memref<16x128xf32, #tpu.memory_space<vmem>>, vector<16x128xf32>,
      %cst_38 = arith.constant 0.000000e+00 : f32
      %54 = vector.broadcast %cst_38 : f32 to vector<16x128xf32>
      %c0_39 = arith.constant 0 : index
      %c0_40 = arith.constant 0 : index
      %55 = vector.load %arg8[%c0_39, %c0_40] : memref<16x128xf32, #tpu.memory_space<vmem>>, vector<16x128xf32>
      tpu.vector_store %arg8[%c0_39, %c0_40], %54 {strides = array<i32>} : memref<16x128xf32, #tpu.memory_space<vmem>>, vector<16x128xf32>,
    } else {
    }
    %c1_i32 = arith.constant 1 : i32
    %3 = arith.muli %arg0, %c1_i32 : i32
    %4 = arith.addi %3, %arg1 : i32
    %c16_i32 = arith.constant 16 : i32
    %5 = arith.muli %4, %c16_i32 : i32
    %6 = tpu.iota {dimensions = array<i32: 0>} : vector<16x128xi32>
    %7 = vector.broadcast %5 : i32 to vector<16x128xi32>
    %8 = arith.addi %7, %6 : vector<16x128xi32>
    %c16_i32_1 = arith.constant 16 : i32
    %9 = vector.broadcast %c16_i32_1 : i32 to vector<16x128xi32>
    %10 = arith.cmpi slt, %8, %9 : vector<16x128xi32>
    %c0 = arith.constant 0 : index
    %c0_2 = arith.constant 0 : index
    %11 = vector.load %arg2[%c0, %c0_2] : memref<16x128xf32, #tpu.memory_space<vmem>>, vector<16x128xf32>
    %cst = arith.constant 0.000000e+00 : f32
    %12 = vector.broadcast %cst : f32 to vector<16x128xf32>
    %13 = arith.select %10, %11, %12 : vector<16x128xi1>, vector<16x128xf32>
    %c0_3 = arith.constant 0 : index
    %c0_4 = arith.constant 0 : index
    %14 = vector.load %arg3[%c0_3, %c0_4] : memref<16x128xf32, #tpu.memory_space<vmem>>, vector<16x128xf32>
    %cst_5 = arith.constant 0.000000e+00 : f32
    %15 = vector.broadcast %cst_5 : f32 to vector<16x128xf32>
    %16 = arith.select %10, %14, %15 : vector<16x128xi1>, vector<16x128xf32>
    %c0_6 = arith.constant 0 : index
    %c0_7 = arith.constant 0 : index
    %17 = vector.load %arg5[%c0_6, %c0_7] : memref<16x128xf32, #tpu.memory_space<vmem>>, vector<16x128xf32>
    %18 = arith.mulf %13, %16 : vector<16x128xf32>
    %19 = arith.addf %17, %18 : vector<16x128xf32>
    %c0_8 = arith.constant 0 : index
    %c0_9 = arith.constant 0 : index
    %20 = vector.load %arg5[%c0_8, %c0_9] : memref<16x128xf32, #tpu.memory_space<vmem>>, vector<16x128xf32>
    tpu.vector_store %arg5[%c0_8, %c0_9], %19 {strides = array<i32>} : memref<16x128xf32, #tpu.memory_space<vmem>>, vector<16x128xf32>,
    %c0_10 = arith.constant 0 : index
    %c0_11 = arith.constant 0 : index
    %21 = vector.load %arg6[%c0_10, %c0_11] : memref<16x128xf32, #tpu.memory_space<vmem>>, vector<16x128xf32>
    %22 = arith.addf %21, %13 : vector<16x128xf32>
    %c0_12 = arith.constant 0 : index
    %c0_13 = arith.constant 0 : index
    %23 = vector.load %arg6[%c0_12, %c0_13] : memref<16x128xf32, #tpu.memory_space<vmem>>, vector<16x128xf32>
    tpu.vector_store %arg6[%c0_12, %c0_13], %22 {strides = array<i32>} : memref<16x128xf32, #tpu.memory_space<vmem>>, vector<16x128xf32>,
    %c0_14 = arith.constant 0 : index
    %c0_15 = arith.constant 0 : index
    %24 = vector.load %arg7[%c0_14, %c0_15] : memref<16x128xf32, #tpu.memory_space<vmem>>, vector<16x128xf32>
    %25 = arith.addf %24, %16 : vector<16x128xf32>
    %c0_16 = arith.constant 0 : index
    %c0_17 = arith.constant 0 : index
    %26 = vector.load %arg7[%c0_16, %c0_17] : memref<16x128xf32, #tpu.memory_space<vmem>>, vector<16x128xf32>
    tpu.vector_store %arg7[%c0_16, %c0_17], %25 {strides = array<i32>} : memref<16x128xf32, #tpu.memory_space<vmem>>, vector<16x128xf32>,
    %27 = math.log %13 : vector<16x128xf32>
    %cst_18 = arith.constant -1.000000e+02 : f32
    %28 = vector.broadcast %cst_18 : f32 to vector<16x128xf32>
    %29 = arith.maximumf %27, %28 : vector<16x128xf32>
    %cst_19 = arith.constant 1.000000e+00 : f32
    %30 = vector.broadcast %cst_19 : f32 to vector<16x128xf32>
    %31 = arith.subf %30, %13 : vector<16x128xf32>
    %32 = math.log %31 : vector<16x128xf32>
    %cst_20 = arith.constant -1.000000e+02 : f32
    %33 = vector.broadcast %cst_20 : f32 to vector<16x128xf32>
    %34 = arith.maximumf %32, %33 : vector<16x128xf32>
    %c0_21 = arith.constant 0 : index
    %c0_22 = arith.constant 0 : index
    %35 = vector.load %arg8[%c0_21, %c0_22] : memref<16x128xf32, #tpu.memory_space<vmem>>, vector<16x128xf32>
    %36 = arith.mulf %16, %29 : vector<16x128xf32>
    %cst_23 = arith.constant 1.000000e+00 : f32
    %37 = vector.broadcast %cst_23 : f32 to vector<16x128xf32>
    %38 = arith.subf %37, %16 : vector<16x128xf32>
    %39 = arith.mulf %38, %34 : vector<16x128xf32>
    %40 = arith.addf %36, %39 : vector<16x128xf32>
    %cst_24 = arith.constant 0.000000e+00 : f32
    %41 = vector.broadcast %cst_24 : f32 to vector<16x128xf32>
    %42 = arith.subf %41, %40 : vector<16x128xf32>
    %43 = arith.addf %35, %42 : vector<16x128xf32>
    %c0_25 = arith.constant 0 : index
    %c0_26 = arith.constant 0 : index
    %44 = vector.load %arg8[%c0_25, %c0_26] : memref<16x128xf32, #tpu.memory_space<vmem>>, vector<16x128xf32>
    tpu.vector_store %arg8[%c0_25, %c0_26], %43 {strides = array<i32>} : memref<16x128xf32, #tpu.memory_space<vmem>>, vector<16x128xf32>,
    %c0_i32_27 = arith.constant 0 : i32
    %45 = arith.cmpi eq, %arg1, %c0_i32_27 : i32
    %46 = arith.extui %45 : i1 to i32
    %c0_i32_28 = arith.constant 0 : i32
    %47 = arith.cmpi ne, %46, %c0_i32_28 : i32
    scf.if %47 {
      %c0_29 = arith.constant 0 : index
      %c0_30 = arith.constant 0 : index
      %48 = vector.load %arg5[%c0_29, %c0_30] : memref<16x128xf32, #tpu.memory_space<vmem>>, vector<16x128xf32>
      %cst_31 = arith.constant dense<0.000000e+00> : vector<128xf32>
      %49 = vector.multi_reduction <add>, %48, %cst_31 [0] : vector<16x128xf32> to vector<128xf32>
      %50 = vector.shape_cast %49 : vector<128xf32> to vector<1x128xf32>
      %c0_32 = arith.constant 0 : index
      %c0_33 = arith.constant 0 : index
      %51 = vector.load %arg6[%c0_32, %c0_33] : memref<16x128xf32, #tpu.memory_space<vmem>>, vector<16x128xf32>
      %cst_34 = arith.constant dense<0.000000e+00> : vector<128xf32>
      %52 = vector.multi_reduction <add>, %51, %cst_34 [0] : vector<16x128xf32> to vector<128xf32>
      %53 = vector.shape_cast %52 : vector<128xf32> to vector<1x128xf32>
      %c0_35 = arith.constant 0 : index
      %c0_36 = arith.constant 0 : index
      %54 = vector.load %arg7[%c0_35, %c0_36] : memref<16x128xf32, #tpu.memory_space<vmem>>, vector<16x128xf32>
      %cst_37 = arith.constant dense<0.000000e+00> : vector<128xf32>
      %55 = vector.multi_reduction <add>, %54, %cst_37 [0] : vector<16x128xf32> to vector<128xf32>
      %56 = vector.shape_cast %55 : vector<128xf32> to vector<1x128xf32>
      %c0_38 = arith.constant 0 : index
      %c0_39 = arith.constant 0 : index
      %57 = vector.load %arg8[%c0_38, %c0_39] : memref<16x128xf32, #tpu.memory_space<vmem>>, vector<16x128xf32>
      %cst_40 = arith.constant dense<0.000000e+00> : vector<128xf32>
      %58 = vector.multi_reduction <add>, %57, %cst_40 [0] : vector<16x128xf32> to vector<128xf32>
      %59 = vector.shape_cast %58 : vector<128xf32> to vector<1x128xf32>
      %60 = tpu.concatenate %50, %53, %56, %59 in 0 : vector<1x128xf32>, vector<1x128xf32>, vector<1x128xf32>, vector<1x128xf32> -> vector<4x128xf32>
      %61 = vector.shape_cast %60 : vector<4x128xf32> to vector<1x4x128xf32>
      %c0_41 = arith.constant 0 : index
      %c0_42 = arith.constant 0 : index
      %c0_43 = arith.constant 0 : index
      %62 = vector.load %arg4[%c0_41, %c0_42, %c0_43] : memref<1x4x128xf32, #tpu.memory_space<vmem>>, vector<1x4x128xf32>
      tpu.vector_store %arg4[%c0_41, %c0_42, %c0_43], %61 {strides = array<i32>} : memref<1x4x128xf32, #tpu.memory_space<vmem>>, vector<1x4x128xf32>,
    } else {
    }
    return
  }
  func.func @transform_0(%arg0: i32, %arg1: i32) -> (i32, i32) {
    %c1_i32 = arith.constant 1 : i32
    %0 = arith.muli %arg0, %c1_i32 : i32
    %1 = arith.addi %0, %arg1 : i32
    %c0_i32 = arith.constant 0 : i32
    %2 = arith.minsi %1, %c0_i32 : i32
    %c0_i32_0 = arith.constant 0 : i32
    %c0_i32_1 = arith.constant 0 : i32
    return %2, %c0_i32_0 : i32, i32
  }
  func.func @transform_1(%arg0: i32, %arg1: i32) -> (i32, i32) {
    %c1_i32 = arith.constant 1 : i32
    %0 = arith.muli %arg0, %c1_i32 : i32
    %1 = arith.addi %0, %arg1 : i32
    %c0_i32 = arith.constant 0 : i32
    %2 = arith.minsi %1, %c0_i32 : i32
    %c0_i32_0 = arith.constant 0 : i32
    %c0_i32_1 = arith.constant 0 : i32
    return %2, %c0_i32_0 : i32, i32
  }
  func.func @transform_2(%arg0: i32, %arg1: i32) -> (i32, i32, i32) {
    %c0_i32 = arith.constant 0 : i32
    %c0_i32_0 = arith.constant 0 : i32
    %c0_i32_1 = arith.constant 0 : i32
    return %arg0, %c0_i32, %c0_i32_0 : i32, i32, i32
  }
}

</mosaic_0001>

<llo_original>
// kernel: tpu_custom_call.1
$region0: #{tpu_custom_call.1}
  #allocation0 [shape = 'u32[]', space=smem, size = 0x4, offset = 0x4, fixed_abs, tag = 'smem constant byte address 0x4 - core index']
  #allocation1 [shape = 'u32[144,128]{1,0:T(1,128)}', space=vmem, size = 0x12000, scoped, tag = 'internal scratch']
  #allocation2 [shape = 'f32[16,128]{1,0:T(8,128)}', space=vmem, size = 0x2000, scoped, tag = 'scratch operand']
  #allocation3 [shape = 'f32[16,128]{1,0:T(8,128)}', space=vmem, size = 0x2000, scoped, tag = 'scratch operand']
  #allocation4 [shape = 'f32[16,128]{1,0:T(8,128)}', space=vmem, size = 0x2000, scoped, tag = 'scratch operand']
  #allocation5 [shape = 'f32[16,128]{1,0:T(8,128)}', space=vmem, size = 0x2000, scoped, tag = 'scratch operand']
  %s0 = inlined_call_operand.hbm [shape: f32[16,128], index: 0, kind: input, shape index: {}]
  %s1 = inlined_call_operand.hbm [shape: f32[16,128], index: 1, kind: input, shape index: {}]
  %s2 = inlined_call_operand.hbm [shape: f32[2,4,128], index: 2, kind: output, shape index: {}]
  %s3 = sld [smem:[#allocation0]]
  $region57: #{tpu_custom_call.1} parent=0
    _
  %s5 = ssub.s32 1, %s3
  %s6 = scalar_select 0, %s5, %s3
  $region1: #{tpu_custom_call.1} parent=0
    #allocation6 [shape = 'u8[16384]{0}', space=vmem, size = 0x4000, scoped, tag = 'input window, operand 0']
    #allocation7 [shape = 's32[2]{0}', space=sflag, size = 0x8, scoped, tag = 'scoped memory for tpu_custom_call.1']
    #allocation8 [shape = 's32[2]{0}', space=sflag, size = 0x8, scoped, tag = 'scoped memory for tpu_custom_call.1']
    #allocation9 [shape = 'u8[16384]{0}', space=vmem, size = 0x4000, scoped, tag = 'input window, operand 1']
    #allocation10 [shape = 's32[2]{0}', space=sflag, size = 0x8, scoped, tag = 'scoped memory for tpu_custom_call.1']
    #allocation11 [shape = 'u8[4096]{0}', space=vmem, size = 0x1000, scoped, tag = 'output window, operand 0']
    %7 = vsyncpa [#allocation7], 0
    %s8 = scalar_lea.sflag [#allocation7], 1
    %9 = vsyncpa %s8, 0
    %10 = vsyncpa [#allocation10], 0
    %s11 = scalar_lea.sflag [#allocation10], 1
    %12 = vsyncpa %s11, 0
    %13 = vsyncpa [#allocation8], 0
    %s14 = scalar_lea.sflag [#allocation8], 1
    %15 = vsyncpa %s14, 0
    loop: start=0, step=1, limit=4
    $region2: #{tpu_custom_call.1} parent=1 // loop_pre_header
      _
    $region3: #{tpu_custom_call.1} parent=1 // loop_header
      %s17 = sphi 0, %s21
      %p18 = scmp.ge.s32.totalorder %s17, 4
      %s24 = sphi 0, %s36
      %s25 = sphi 0, %s32
      %s26 = sphi 0, %s24
      %s27 = sphi 0, %s25
      %s28 = sphi 0, %s26
      %s29 = sphi 0, %s27
      %s45 = sphi 0, %s47
      %s48 = sphi 0, %s45
      %s49 = sphi 0, %s48
      %s65 = sphi 0, %s49
      %s77 = sphi 0, %s79
      %s80 = sphi 0, %s77
      %s81 = sphi 0, %s80
      %s97 = sphi 0, %s81
      %s103 = sphi 0, %s105
      %s106 = sphi 0, %s103
      %s107 = sphi 0, %s106
      %s123 = sphi 0, %s107
    $region4: #{tpu_custom_call.1} parent=1 // loop_header_branch
      %20 = sbr.rel (%p18) target = $region8
    $region5: #{tpu_custom_call.1} parent=1 // loop_body
      %s22 = ssub.s32 %s17, 1
      %s23 = ssub.s32 %s17, 2
      %s30 = sadd.s32 1, %s25
      %p31 = scmp.ge.s32.totalorder %s30, 1
      %s32 = scalar_select %p31, 0, %s30
      %s33 = sadd.s32 1, %s24
      %s34 = scalar_select %p31, %s33, %s24
      %p35 = scmp.ge.s32.totalorder %s34, 2
      %s36 = scalar_select %p35, 0, %s34
      %s37 = sadd.s32 %s24, %s25
      %p38 = scmp.lt.s32.totalorder %s37, 0
      %s39 = scalar_select %p38, %s37, 0
      %s40 = sadd.s32 %s36, %s32
      %p41 = scmp.lt.s32.totalorder %s40, 0
      %s42 = scalar_select %p41, %s40, 0
      %s43 = ssub.s32 %s39, %s42
      %p44 = scmp.eq.s32.totalorder %s43, 0
      %s46 = sadd.s32 %s45, 1
      %s47 = scalar_select %p44, %s45, %s46
      %p50 = pneg %p44
      %p51 = scmp.eq.s32.totalorder %s17, 1
      %p52 = por %p50, %p51
      %p53 = scmp.ne.s32.totalorder %s45, %s48
      %p54 = scmp.eq.s32.totalorder %s17, 0
      %p55 = por %p53, %p54
      %p56 = scmp.ne.s32.totalorder %s45, %s48
      %p57 = scmp.eq.s32.totalorder %s22, 1
      %p58 = por %p56, %p57
      %p59 = scmp.ne.s32.totalorder %s48, %s49
      %p60 = scmp.eq.s32.totalorder %s22, 0
      %p61 = por %p59, %p60
      %p62 = scmp.ne.s32.totalorder %s48, %s49
      %p63 = scmp.eq.s32.totalorder %s23, 1
      %p64 = por %p62, %p63
      %p66 = scmp.ne.s32.totalorder %s49, %s65
      %p67 = scmp.eq.s32.totalorder %s23, 0
      %p68 = por %p66, %p67
      %s69 = sadd.s32 %s24, %s25
      %p70 = scmp.lt.s32.totalorder %s69, 0
      %s71 = scalar_select %p70, %s69, 0
      %s72 = sadd.s32 %s36, %s32
      %p73 = scmp.lt.s32.totalorder %s72, 0
      %s74 = scalar_select %p73, %s72, 0
      %s75 = ssub.s32 %s71, %s74
      %p76 = scmp.eq.s32.totalorder %s75, 0
      %s78 = sadd.s32 %s77, 1
      %s79 = scalar_select %p76, %s77, %s78
      %p82 = pneg %p76
      %p83 = scmp.eq.s32.totalorder %s17, 1
      %p84 = por %p82, %p83
      %p85 = scmp.ne.s32.totalorder %s77, %s80
      %p86 = scmp.eq.s32.totalorder %s17, 0
      %p87 = por %p85, %p86
      %p88 = scmp.ne.s32.totalorder %s77, %s80
      %p89 = scmp.eq.s32.totalorder %s22, 1
      %p90 = por %p88, %p89
      %p91 = scmp.ne.s32.totalorder %s80, %s81
      %p92 = scmp.eq.s32.totalorder %s22, 0
      %p93 = por %p91, %p92
      %p94 = scmp.ne.s32.totalorder %s80, %s81
      %p95 = scmp.eq.s32.totalorder %s23, 1
      %p96 = por %p94, %p95
      %p98 = scmp.ne.s32.totalorder %s81, %s97
      %p99 = scmp.eq.s32.totalorder %s23, 0
      %p100 = por %p98, %p99
      %s101 = ssub.s32 %s24, %s36
      %p102 = scmp.eq.s32.totalorder %s101, 0
      %s104 = sadd.s32 %s103, 1
      %s105 = scalar_select %p102, %s103, %s104
      %p108 = pneg %p102
      %p109 = scmp.eq.s32.totalorder %s17, 1
      %p110 = por %p108, %p109
      %p111 = scmp.ne.s32.totalorder %s103, %s106
      %p112 = scmp.eq.s32.totalorder %s17, 0
      %p113 = por %p111, %p112
      %p114 = scmp.ne.s32.totalorder %s103, %s106
      %p115 = scmp.eq.s32.totalorder %s22, 1
      %p116 = por %p114, %p115
      %p117 = scmp.ne.s32.totalorder %s106, %s107
      %p118 = scmp.eq.s32.totalorder %s22, 0
      %p119 = por %p117, %p118
      %p120 = scmp.ne.s32.totalorder %s106, %s107
      %p121 = scmp.eq.s32.totalorder %s23, 1
      %p122 = por %p120, %p121
      %p124 = scmp.ne.s32.totalorder %s107, %s123
      %p125 = scmp.eq.s32.totalorder %s23, 0
      %p126 = por %p124, %p125
      %p127 = scmp.le.s32.totalorder 1, %s17
      %p128 = scmp.lt.s32.totalorder %s17, 3
      %p129 = pnand %p127, %p128
      %p130 = pneg %p129
      // Predicated region
      $region9: #{tpu_custom_call.1} parent=5 // pred_check
        _
      $region10: #{tpu_custom_call.1} parent=5 // pred_check_branch
        %132 = sbr.rel (%p129) target = $region12
      $region11: #{tpu_custom_call.1} parent=5 // pred_region
        %s133 = ssub.s32 %s17, 1
      $region12: #{tpu_custom_call.1} parent=5 // pred_fallthru
        _
      %p134 = scmp.lt.s32.totalorder %s17, 2
      // Predicated region
      $region13: #{tpu_custom_call.1} parent=5 // pred_check
        %p135 = pneg %p134
      $region14: #{tpu_custom_call.1} parent=5 // pred_check_branch
        %137 = sbr.rel (%p135) target = $region16
      $region15: #{tpu_custom_call.1} parent=5 // pred_region
        // Predicated region
        $region17: #{tpu_custom_call.1} parent=15 // pred_check
          %p138 = pneg %p55
        $region18: #{tpu_custom_call.1} parent=15 // pred_check_branch
          %140 = sbr.rel (%p138) target = $region20
        $region19: #{tpu_custom_call.1} parent=15 // pred_region
          %s141 = sand.u32 %s45, 1
          %s142 = scalar_lea.sflag [#allocation7], %s141
          %s143 = sand.u32 %s45, 1
          %s144 = smul.addr %s143, 16
          %s145 = scalar_lea.vmem [#allocation6], %s144
          %s146 = sadd.s32 %s24, %s25
          %p147 = scmp.lt.s32.totalorder %s146, 0
          %s148 = scalar_select %p147, %s146, 0
          %s149 = smul.u32 2, %s148
          %s151 = ssub.s32 256, 256
          %152 = vsyncadd %s142, %s151
          %s153 = smul.addr %s149, 128
          %s154 = scalar_lea.hbm %s0, %s153
          %s155 = sshll.u32 %s145, 4
          %s156 = int_to_ptr.vmem [resolvable:$true] %s155
          %161 = dma.hbm_to_vmem [thread:$0]  %s154, 256, %s156, %s142, 128, 128, 8
        $region20: #{tpu_custom_call.1} parent=15 // pred_fallthru
          _
        // Predicated region
        $region21: #{tpu_custom_call.1} parent=15 // pred_check
          %p162 = pneg %p87
        $region22: #{tpu_custom_call.1} parent=15 // pred_check_branch
          %164 = sbr.rel (%p162) target = $region24
        $region23: #{tpu_custom_call.1} parent=15 // pred_region
          %s165 = sand.u32 %s77, 1
          %s166 = scalar_lea.sflag [#allocation10], %s165
          %s167 = sand.u32 %s77, 1
          %s168 = smul.addr %s167, 16
          %s169 = scalar_lea.vmem [#allocation9], %s168
          %s170 = sadd.s32 %s24, %s25
          %p171 = scmp.lt.s32.totalorder %s170, 0
          %s172 = scalar_select %p171, %s170, 0
          %s173 = smul.u32 2, %s172
          %s175 = ssub.s32 256, 256
          %176 = vsyncadd %s166, %s175
          %s177 = smul.addr %s173, 128
          %s178 = scalar_lea.hbm %s1, %s177
          %s179 = sshll.u32 %s169, 4
          %s180 = int_to_ptr.vmem [resolvable:$true] %s179
          %185 = dma.hbm_to_vmem [thread:$0]  %s178, 256, %s180, %s166, 128, 128, 8
        $region24: #{tpu_custom_call.1} parent=15 // pred_fallthru
          _
      $region16: #{tpu_custom_call.1} parent=5 // pred_fallthru
        _
      %p186 = scmp.le.s32.totalorder 1, %s17
      %p187 = scmp.lt.s32.totalorder %s17, 3
      %p188 = pnand %p186, %p187
      %p189 = pneg %p188
      // Predicated region
      $region25: #{tpu_custom_call.1} parent=5 // pred_check
        _
      $region26: #{tpu_custom_call.1} parent=5 // pred_check_branch
        %191 = sbr.rel (%p188) target = $region28
      $region27: #{tpu_custom_call.1} parent=5 // pred_region
        %s192 = ssub.s32 %s17, 1
        %s193 = sand.u32 %s48, 1
        %s194 = scalar_lea.sflag [#allocation7], %s193
        %s195 = sand.u32 %s48, 1
        %s196 = smul.addr %s195, 16
        %s197 = scalar_lea.vmem [#allocation6], %s196
        // Predicated region
        $region29: #{tpu_custom_call.1} parent=27 // pred_check
          %p198 = pneg %p61
        $region30: #{tpu_custom_call.1} parent=27 // pred_check_branch
          %200 = sbr.rel (%p198) target = $region32
        $region31: #{tpu_custom_call.1} parent=27 // pred_region
          %201 = dma.done %s194, 256
        $region32: #{tpu_custom_call.1} parent=27 // pred_fallthru
          _
        %s202 = sand.u32 %s80, 1
        %s203 = scalar_lea.sflag [#allocation10], %s202
        %s204 = sand.u32 %s80, 1
        %s205 = smul.addr %s204, 16
        %s206 = scalar_lea.vmem [#allocation9], %s205
        // Predicated region
        $region33: #{tpu_custom_call.1} parent=27 // pred_check
          %p207 = pneg %p93
        $region34: #{tpu_custom_call.1} parent=27 // pred_check_branch
          %209 = sbr.rel (%p207) target = $region36
        $region35: #{tpu_custom_call.1} parent=27 // pred_region
          %210 = dma.done %s203, 256
        $region36: #{tpu_custom_call.1} parent=27 // pred_fallthru
          _
        %s211 = sand.u32 %s48, 1
        %s212 = scalar_lea.sflag [#allocation7], %s211
        %s213 = sand.u32 %s48, 1
        %s214 = smul.addr %s213, 16
        %s215 = scalar_lea.vmem [#allocation6], %s214
        %p216 = pneg %p61
        %p217 = pneg %p58
        %s218 = sand.u32 %s80, 1
        %s219 = scalar_lea.sflag [#allocation10], %s218
        %s220 = sand.u32 %s80, 1
        %s221 = smul.addr %s220, 16
        %s222 = scalar_lea.vmem [#allocation9], %s221
        %p223 = pneg %p93
        %p224 = pneg %p90
        %p225 = pneg %p119
        %p226 = pneg %p116
        %s227 = sand.u32 %s106, 1
        %s228 = scalar_lea.sflag [#allocation8], %s227
        %s229 = sand.u32 %s106, 1
        %s230 = smul.addr %s229, 4
        %s231 = scalar_lea.vmem [#allocation11], %s230
        %s232 = sadd.s32 %s26, %s27
        %p233 = scmp.lt.s32.totalorder %s232, 0
        %s234 = scalar_select %p233, %s232, 0
        %s235 = smul.u32 2, %s234
        %s236 = sadd.s32 %s26, %s27
        %p237 = scmp.lt.s32.totalorder %s236, 0
        %s238 = scalar_select %p237, %s236, 0
        %s239 = smul.u32 2, %s238
        %p240 = scmp.eq.s32.totalorder %s27, 0
        // Predicated region
        $region37: #{tpu_custom_call.1} parent=27 // pred_check
          %p241 = pneg %p240
        $region38: #{tpu_custom_call.1} parent=27 // pred_check_branch
          %243 = sbr.rel (%p241) target = $region40
        $region39: #{tpu_custom_call.1} parent=27 // pred_region
          %244 = vst [vmem:[#allocation2] sm:$0xff] 0.0
          %245 = vst [vmem:[#allocation2 + $0x8] sm:$0xff] 0.0
          %246 = vst [vmem:[#allocation3] sm:$0xff] 0.0
          %247 = vst [vmem:[#allocation3 + $0x8] sm:$0xff] 0.0
          %248 = vst [vmem:[#allocation4] sm:$0xff] 0.0
          %249 = vst [vmem:[#allocation4 + $0x8] sm:$0xff] 0.0
          %250 = vst [vmem:[#allocation5] sm:$0xff] 0.0
          %251 = vst [vmem:[#allocation5 + $0x8] sm:$0xff] 0.0
        $region40: #{tpu_custom_call.1} parent=27 // pred_fallthru
          _
        %s252 = sadd.s32 %s26, %s27
        %s253 = smul.u32 %s252, 16
        %v254 = vlaneseq
        %v255 = vshrl.u32 %v254, 7
        %v256 = vadd.s32 %v255, 8
        %v257 = vstv %s253
        %v258 = vadd.s32 %v257, %v255
        %v259 = vadd.s32 %v257, %v256
        %vm260 = vcmp.lt.s32.totalorder %v258, 16
        %vm261 = vcmp.lt.s32.totalorder %v259, 16
        %v262 = vld [vmem:[%s197] sm:$0xff]
        %v263 = vld [vmem:[%s197 + $0x8] sm:$0xff]
        %v264 = vsel %vm260, %v262, 0.0
        %v265 = vsel %vm261, %v263, 0.0
        %v266 = vld [vmem:[%s206] sm:$0xff]
        %v267 = vld [vmem:[%s206 + $0x8] sm:$0xff]
        %v268 = vsel %vm260, %v266, 0.0
        %v269 = vsel %vm261, %v267, 0.0
        %v270 = vld [vmem:[#allocation2] sm:$0xff]
        %v271 = vld [vmem:[#allocation2 + $0x8] sm:$0xff]
        %v272 = vmul.f32 %v264, %v268
        %v273 = vmul.f32 %v265, %v269
        %v274 = vadd.f32 %v270, %v272
        %v275 = vadd.f32 %v271, %v273
        %276 = vst [vmem:[#allocation2] sm:$0xff] %v274
        %277 = vst [vmem:[#allocation2 + $0x8] sm:$0xff] %v275
        %v278 = vld [vmem:[#allocation3] sm:$0xff]
        %v279 = vld [vmem:[#allocation3 + $0x8] sm:$0xff]
        %v280 = vadd.f32 %v278, %v264
        %v281 = vadd.f32 %v279, %v265
        %282 = vst [vmem:[#allocation3] sm:$0xff] %v280
        %283 = vst [vmem:[#allocation3 + $0x8] sm:$0xff] %v281
        %v284 = vld [vmem:[#allocation4] sm:$0xff]
        %v285 = vld [vmem:[#allocation4 + $0x8] sm:$0xff]
        %v286 = vadd.f32 %v284, %v268
        %v287 = vadd.f32 %v285, %v269
        %288 = vst [vmem:[#allocation4] sm:$0xff] %v286
        %289 = vst [vmem:[#allocation4 + $0x8] sm:$0xff] %v287
        %v290 = vlog2.pop %v264
        %v291 = vmul.f32 %v290, 0.6931472
        %v292 = vlog2.pop %v265
        %v293 = vmul.f32 %v292, 0.6931472
        %v294 = vmax.f32 %v291, -100.0
        %v295 = vmax.f32 %v293, -100.0
        %v296 = vsub.f32 1.0, %v264
        %v297 = vsub.f32 1.0, %v265
        %v298 = vlog2.pop %v296
        %v299 = vmul.f32 %v298, 0.6931472
        %v300 = vlog2.pop %v297
        %v301 = vmul.f32 %v300, 0.6931472
        %v302 = vmax.f32 %v299, -100.0
        %v303 = vmax.f32 %v301, -100.0
        %v304 = vld [vmem:[#allocation5] sm:$0xff]
        %v305 = vld [vmem:[#allocation5 + $0x8] sm:$0xff]
        %v306 = vmul.f32 %v268, %v294
        %v307 = vmul.f32 %v269, %v295
        %v308 = vsub.f32 1.0, %v268
        %v309 = vsub.f32 1.0, %v269
        %v310 = vmul.f32 %v308, %v302
        %v311 = vmul.f32 %v309, %v303
        %v312 = vadd.f32 %v306, %v310
        %v313 = vadd.f32 %v307, %v311
        %v314 = vsub.f32 0.0, %v312
        %v315 = vsub.f32 0.0, %v313
        %v316 = vadd.f32 %v304, %v314
        %v317 = vadd.f32 %v305, %v315
        %318 = vst [vmem:[#allocation5] sm:$0xff] %v316
        %319 = vst [vmem:[#allocation5 + $0x8] sm:$0xff] %v317
        // Predicated region
        $region41: #{tpu_custom_call.1} parent=27 // pred_check
          %p320 = pneg %p240
        $region42: #{tpu_custom_call.1} parent=27 // pred_check_branch
          %322 = sbr.rel (%p320) target = $region44
        $region43: #{tpu_custom_call.1} parent=27 // pred_region
          %v323 = vld [vmem:[#allocation2] sm:$0xff]
          %v324 = vld [vmem:[#allocation2 + $0x8] sm:$0xff]
          %v325 = vadd.f32 %v323, %v324
          %v326 = vrot.slane %v325, 4
          %v327 = vadd.f32 %v325, %v326
          %v328 = vrot.slane %v327, 2
          %v329 = vadd.f32 %v327, %v328
          %v330 = vrot.slane %v329, 1
          %v331 = vadd.f32 %v329, %v330
          %v332 = vld [vmem:[#allocation3] sm:$0xff]
          %v333 = vld [vmem:[#allocation3 + $0x8] sm:$0xff]
          %v334 = vadd.f32 %v332, %v333
          %v335 = vrot.slane %v334, 4
          %v336 = vadd.f32 %v334, %v335
          %v337 = vrot.slane %v336, 2
          %v338 = vadd.f32 %v336, %v337
          %v339 = vrot.slane %v338, 1
          %v340 = vadd.f32 %v338, %v339
          %v341 = vld [vmem:[#allocation4] sm:$0xff]
          %v342 = vld [vmem:[#allocation4 + $0x8] sm:$0xff]
          %v343 = vadd.f32 %v341, %v342
          %v344 = vrot.slane %v343, 4
          %v345 = vadd.f32 %v343, %v344
          %v346 = vrot.slane %v345, 2
          %v347 = vadd.f32 %v345, %v346
          %v348 = vrot.slane %v347, 1
          %v349 = vadd.f32 %v347, %v348
          %v350 = vld [vmem:[#allocation5] sm:$0xff]
          %v351 = vld [vmem:[#allocation5 + $0x8] sm:$0xff]
          %v352 = vadd.f32 %v350, %v351
          %v353 = vrot.slane %v352, 4
          %v354 = vadd.f32 %v352, %v353
          %v355 = vrot.slane %v354, 2
          %v356 = vadd.f32 %v354, %v355
          %v357 = vrot.slane %v356, 1
          %v358 = vadd.f32 %v356, %v357
          %vm359 = vcmask 1040384
          %v360 = vsel %vm359, %v331, %v340
          %vm361 = vcmask 1041408
          %v362 = vsel %vm361, %v360, %v349
          %vm363 = vcmask 1042432
          %v364 = vsel %vm363, %v362, %v358
          %365 = vst [vmem:[%s231] sm:$0xf] %v364
        $region44: #{tpu_custom_call.1} parent=27 // pred_fallthru
          _
        %s366 = sand.u32 %s106, 1
        %s367 = scalar_lea.sflag [#allocation8], %s366
        %s368 = sand.u32 %s106, 1
        %s369 = smul.addr %s368, 4
        %s370 = scalar_lea.vmem [#allocation11], %s369
        // Predicated region
        $region45: #{tpu_custom_call.1} parent=27 // pred_check
          %p371 = pneg %p116
        $region46: #{tpu_custom_call.1} parent=27 // pred_check_branch
          %373 = sbr.rel (%p371) target = $region48
        $region47: #{tpu_custom_call.1} parent=27 // pred_region
          %s375 = ssub.s32 64, 64
          %376 = vsyncadd %s367, %s375
          %s377 = smul.addr %s26, 64
          %s378 = scalar_lea.hbm %s2, %s377
          %s380 = sshll.u32 %s370, 4
          %s381 = int_to_ptr.vmem [resolvable:$true] %s380
          %383 = dma.vmem_to_hbm [thread:$0]  %s381, 64, %s378, %s367
        $region48: #{tpu_custom_call.1} parent=27 // pred_fallthru
          _
      $region28: #{tpu_custom_call.1} parent=5 // pred_fallthru
        _
      %p384 = scmp.le.s32.totalorder 2, %s17
      // Predicated region
      $region49: #{tpu_custom_call.1} parent=5 // pred_check
        %p385 = pneg %p384
      $region50: #{tpu_custom_call.1} parent=5 // pred_check_branch
        %387 = sbr.rel (%p385) target = $region52
      $region51: #{tpu_custom_call.1} parent=5 // pred_region
        %s388 = ssub.s32 %s17, 2
        // Predicated region
        $region53: #{tpu_custom_call.1} parent=51 // pred_check
          %p389 = pneg %p122
        $region54: #{tpu_custom_call.1} parent=51 // pred_check_branch
          %391 = sbr.rel (%p389) target = $region56
        $region55: #{tpu_custom_call.1} parent=51 // pred_region
          %s392 = sand.u32 %s107, 1
          %s393 = scalar_lea.sflag [#allocation8], %s392
          %s394 = sand.u32 %s107, 1
          %s395 = smul.addr %s394, 4
          %s396 = scalar_lea.vmem [#allocation11], %s395
          %397 = dma.done %s393, 64
        $region56: #{tpu_custom_call.1} parent=51 // pred_fallthru
          _
      $region52: #{tpu_custom_call.1} parent=5 // pred_fallthru
        _
    $region6: #{tpu_custom_call.1} parent=1 // loop_footer
      %s21 = sadd.s32 1, %s17
    $region7: #{tpu_custom_call.1} parent=1 // loop_footer_branch
      %16 = sbr.rel target = $region3
    $region8: #{tpu_custom_call.1} parent=1 // loop_exit
      _
    %398 = vsyncpa [#allocation7], 1
    %s399 = scalar_lea.sflag [#allocation7], 1
    %400 = vsyncpa %s399, 1
    %401 = vsyncpa [#allocation10], 1
    %s402 = scalar_lea.sflag [#allocation10], 1
    %403 = vsyncpa %s402, 1
    %404 = vsyncpa [#allocation8], 1
    %s405 = scalar_lea.sflag [#allocation8], 1
    %406 = vsyncpa %s405, 1

</llo_original>
